<compile_context>
chip_gen: v7x
topology: tpu7x:2x2x1
jax: 0.10.0
libtpu: 0.0.40
codegen_flags: <defaults>
</compile_context>

<pallas_src>
import math
from functools import partial

import jax
import jax.numpy as jnp
from jax.experimental import pallas as pl
from jax.experimental.pallas import tpu as pltpu


def _round_up(x, m):
    return ((x + m - 1) // m) * m


def _expand_coords_kernel(pos_ref, idx_ref, *opt_w, sigmas, capacity, emit_weights):
    """Hashed simplex-vertex slots (and optional barycentric weights) for one point tile.

    pos_ref: (d, 8, TL) f32     idx_ref: (d+1, 8, TL) i32     opt_w: ((d+1, 8, TL) f32,)?
    Every per-coordinate row is a dense (8, TL) slab (full sublanes); the small d+1
    coordinate loops stay unrolled Python loops.
    """
    w_ref = opt_w[0] if emit_weights else None
    d = pos_ref.shape[0]
    tl = pos_ref.shape[2]
    down = 1.0 / (d + 1)
    up = float(d + 1)
    inv_std_dev = (d + 1) * math.sqrt(2.0 / 3.0)

    # ---- elevate onto the permutohedral hyperplane (sigma folded into the scale) ----
    elevated = [None] * (d + 1)
    sm = jnp.zeros((8, tl), jnp.float32)
    for i in range(d, 0, -1):
        scale = inv_std_dev / (math.sqrt(i * (i + 1)) * sigmas[i - 1])
        cf = pos_ref[i - 1].astype(jnp.float32) * scale
        elevated[i] = sm - float(i) * cf
        sm = sm + cf
    elevated[0] = sm

    # ---- closest zero-colored lattice point (rem0; entries are exact multiples of d+1) ----
    rem0_f = [None] * (d + 1)
    diff = [None] * (d + 1)
    rem0_sum = jnp.zeros((8, tl), jnp.float32)
    for i in range(d + 1):
        v = elevated[i] * down
        upv = jnp.ceil(v) * up
        dnv = jnp.floor(v) * up
        rem0_f[i] = jnp.where(upv - elevated[i] < elevated[i] - dnv, upv, dnv)
        diff[i] = elevated[i] - rem0_f[i]
        rem0_sum = rem0_sum + rem0_f[i]
    # rem0_f values (and their sum) are exact integers in f32 for normalized inputs
    # (|elevated| << 2^23), so one division + round is exact.
    sum_i = jnp.round(rem0_sum * down).astype(jnp.int32)

    # ---- rank of every coordinate (ties broken by index, matching the CUDA pair loop) ----
    rank = [None] * (d + 1)
    for i in range(d + 1):
        r = jnp.zeros((8, tl), jnp.int32)
        for j in range(d + 1):
            if j == i:
                continue
            beats = (diff[j] >= diff[i]) if j < i else (diff[j] > diff[i])
            r = r + beats.astype(jnp.int32)
        rank[i] = r

    # ---- wrap rank / rem0 into [0, d] ----
    rank_c = [None] * (d + 1)
    rem0_c = [None] * (d + 1)
    adj_f = [None] * (d + 1)
    for i in range(d + 1):
        rs = rank[i] + sum_i
        adj = jnp.where(rs < 0, d + 1, 0) - jnp.where(rs > d, d + 1, 0)
        rank_c[i] = rs + adj
        rem0_c[i] = rem0_f[i].astype(jnp.int32) + adj
        adj_f[i] = adj.astype(jnp.float32)

    # ---- barycentric coordinates (only when requested: expand never consumes them) ----
    if emit_weights:
        bary = [jnp.zeros((8, tl), jnp.float32) for _ in range(d + 2)]
        for i in range(d + 1):
            delta = (diff[i] - adj_f[i]) * down        # (elevated - wrapped rem0) * down
            for t in range(d + 2):
                bary[t] = (bary[t]
                           + jnp.where(rank_c[i] == d - t, delta, 0.0)
                           - jnp.where(rank_c[i] == d - t + 1, delta, 0.0))
        bary[0] = bary[0] + 1.0 + bary[d + 1]
        for t in range(d + 1):
            w_ref[t] = bary[t]

    # ---- hashed lattice slot of every simplex vertex ----
    for m in range(d + 1):
        h = jnp.zeros((8, tl), jnp.int32)
        for i in range(d):
            key_i = rem0_c[i] + m - jnp.where(rank_c[i] > d - m, d + 1, 0)
            h = (h + key_i) * 2531011                  # int32 wraparound == CUDA hash
        idx_ref[m] = jnp.bitwise_and(h, capacity - 1)


def _expand_counts_kernel(idx_ref, cnt_ref, *, d, tc):
    """Per-slot touch counts for one (capacity tile, point tile) grid step.

    idx_ref: (d+1, TNP) i32, lane-dense (points on lanes)
    cnt_ref: (TC, 8) f32 resident accumulator (capacity slots on sublanes)
    For each of the d+1 simplex vertices a bf16 one-hot (TC, TNP) is built with a single
    compare/select and reduced over points by one MXU matmul (no RMW passes over a dense
    intermediate; MXU was otherwise idle).
    """
    tnp = idx_ref.shape[1]

    @pl.when(pl.program_id(1) == 0)
    def _():
        cnt_ref[...] = jnp.zeros_like(cnt_ref)

    base = pl.program_id(0) * tc                              # offset applied to the 1-row idx
    c_iota = jax.lax.broadcasted_iota(jnp.int32, (tc, tnp), 0)  # grid-step invariant
    ones_rhs = jnp.ones((tnp, 8), jnp.bfloat16)
    one = jnp.bfloat16(1.0)
    zero = jnp.bfloat16(0.0)
    # TODO(synk): on v5e (no bf16 VALU) an f32 one-hot build + single bf16 cast may lower better.
    acc = cnt_ref[...]
    for k in range(d + 1):
        row = idx_ref[k:k + 1, :] - base                      # (1, TNP) cheap op
        oh = jnp.where(row == c_iota, one, zero)              # (TC, TNP) bf16
        acc = acc + jnp.dot(oh, ones_rhs, preferred_element_type=jnp.float32)
    cnt_ref[...] = acc


def expand_lattice_forward(lattice_values, lattice_state, positions, *,
                           point_multiplier, noise_stddev, expand_values, noise_key,
                           compute_weights=False):
    """JAX/Pallas equivalent of ExpandLatticeModule.forward.

    Returns (expanded_lattice_values, expanded_lattice_state, aux) where aux holds the
    hashed simplex-vertex slots (and optionally barycentric weights) of the expanded
    points, for debugging/verification.
    """
    capacity = int(lattice_state["capacity"])
    assert capacity >= 128 and (capacity & (capacity - 1)) == 0, \
        "capacity must be a power of two >= 128"
    sigmas = tuple(float(s) for s in lattice_state["sigmas"])
    old_occ = lattice_state["occupancy"]

    n, d = positions.shape

    # --- expand positions: point_multiplier noisy copies of every point ---
    m_total = n * point_multiplier
    noise = noise_stddev * jax.random.normal(noise_key, (m_total, d), jnp.float32)
    pos_exp = jnp.tile(positions.astype(jnp.float32), (point_multiplier, 1)) + noise

    # --- point layout: points live on a dense (8 sublane x cols lane) grid, tiled on lanes
    #     (pad rows are copies of expanded point 0 -> they only re-touch touched slots) ---
    cols = _round_up((m_total + 7) // 8, 256)        # mp = 8*cols is a multiple of 2048
    if cols <= 1024:
        tl = cols                                    # single tile for small inputs
    else:
        tl = 512                                     # 8*512 = 4096 points per grid step
        cols = _round_up(cols, tl)
    mp = 8 * cols
    if mp > m_total:
        pad = jnp.broadcast_to(pos_exp[0:1], (mp - m_total, d))
        pos_exp = jnp.concatenate([pos_exp, pad], axis=0)
    pos_3d = pos_exp.T.reshape(d, 8, cols)           # point p -> [:, p // cols, p % cols]

    # --- kernel 1: permutohedral simplex slots (+ optional weights), tiled over points ---
    coords_kernel = partial(_expand_coords_kernel, sigmas=sigmas, capacity=capacity,
                            emit_weights=compute_weights)
    out_blk = pl.BlockSpec((d + 1, 8, tl), lambda i: (0, 0, i))
    if compute_weights:
        out_specs = (out_blk, out_blk)
        out_shape = (jax.ShapeDtypeStruct((d + 1, 8, cols), jnp.int32),
                     jax.ShapeDtypeStruct((d + 1, 8, cols), jnp.float32))
    else:
        out_specs = out_blk
        out_shape = jax.ShapeDtypeStruct((d + 1, 8, cols), jnp.int32)
    res = pl.pallas_call(
        coords_kernel,
        grid=(cols // tl,),
        in_specs=[pl.BlockSpec((d, 8, tl), lambda i: (0, 0, i))],
        out_specs=out_specs,
        out_shape=out_shape,
        compiler_params=pltpu.CompilerParams(dimension_semantics=("parallel",)),
    )(pos_3d)
    if compute_weights:
        idx_3d, w_3d = res
    else:
        idx_3d, w_3d = res, None

    # Free reshape: kernel 2 consumes slots in exactly this lane-dense (d+1, mp) layout.
    idx_2d = idx_3d.reshape(d + 1, mp)

    # --- kernel 2: per-slot touch counts, tiled (capacity x points), resident accumulator ---
    tnp = 2048                                        # mp is always a multiple of 2048
    tc = min(capacity, 512)                           # keeps one-hots + iota ~13 MiB worst case
    counts = pl.pallas_call(
        partial(_expand_counts_kernel, d=d, tc=tc),
        grid=(capacity // tc, mp // tnp),
        in_specs=[pl.BlockSpec((d + 1, tnp), lambda ci, mi: (0, mi))],
        out_specs=pl.BlockSpec((tc, 8), lambda ci, mi: (ci, 0)),
        out_shape=jax.ShapeDtypeStruct((capacity, 8), jnp.float32),
        compiler_params=pltpu.CompilerParams(
            dimension_semantics=("parallel", "arbitrary"),
            vmem_limit_bytes=32 * 1024 * 1024),
    )(idx_2d)

    touched = counts[:, 0] > 0.5
    new_occ = jnp.logical_or(old_occ, touched)

    if expand_values:
        # vertices that existed before keep their values; newly created vertices get zeros
        new_values = jnp.where(old_occ[:, None], lattice_values.astype(jnp.float32), 0.0)
    else:
        new_values = lattice_values

    new_state = dict(lattice_state)
    new_state["occupancy"] = new_occ
    new_state["values"] = new_values

    aux = {
        "slots": idx_2d[:, :m_total].T,     # (M, d+1) hashed simplex-vertex slots
        "weights": (w_3d.reshape(d + 1, mp)[:, :m_total].T if compute_weights else None),
        "counts": counts[:, 0],             # (capacity,) touch counts (includes padded dups)
    }
    return new_values, new_state, aux


class ExpandLatticeModule:
    """Module-facing API mirroring latticenet's ExpandLatticeModule.forward -> (lv, ls)."""

    def __init__(self, point_multiplier, noise_stddev, expand_values):
        self.point_multiplier = point_multiplier
        self.noise_stddev = noise_stddev
        self.expand_values = expand_values

    def __call__(self, lattice_values, lattice_structure, positions, *, noise_key):
        lv, ls, _ = expand_lattice_forward(
            lattice_values, lattice_structure, positions,
            point_multiplier=self.point_multiplier,
            noise_stddev=self.noise_stddev,
            expand_values=self.expand_values,
            noise_key=noise_key)
        return lv, ls


if __name__ == "__main__":
    key = jax.random.PRNGKey(0)
    k_pos, k_val, k_base, k_noise = jax.random.split(key, 4)

    n, pos_dim, val_dim = 96, 3, 4
    capacity = 2048
    sigmas = (0.25, 0.25, 0.25)
    point_multiplier = 8
    noise_stddev = 0.05
    expand_values = True

    positions = jax.random.uniform(k_pos, (n, pos_dim), jnp.float32, minval=-1.0, maxval=1.0)

    # Base lattice: occupancy of the un-expanded splat of `positions` (multiplier=1, no
    # noise), with deterministic values on occupied vertices (stand-in for a prior splat).
    empty_state = {"capacity": capacity, "sigmas": sigmas,
                   "occupancy": jnp.zeros((capacity,), jnp.bool_),
                   "values": jnp.zeros((capacity, val_dim), jnp.float32)}
    _, base_state, _ = expand_lattice_forward(
        jnp.zeros((capacity, val_dim), jnp.float32), empty_state, positions,
        point_multiplier=1, noise_stddev=0.0, expand_values=True, noise_key=k_base)
    base_occ = base_state["occupancy"]
    base_values = jax.random.normal(k_val, (capacity, val_dim), jnp.float32) * base_occ[:, None]
    base_state = dict(base_state, values=base_values)

    # ---- forward under test (weights requested only for the self-check below) ----
    lv, ls, aux = expand_lattice_forward(
        base_values, base_state, positions,
        point_multiplier=point_multiplier, noise_stddev=noise_stddev,
        expand_values=expand_values, noise_key=k_noise, compute_weights=True)
    jax.block_until_ready(lv)

    # module-facing API returns (lv, ls) like the torch module (no weights path), identical results
    module = ExpandLatticeModule(point_multiplier, noise_stddev, expand_values)
    lv_m, ls_m = module(base_values, base_state, positions, noise_key=k_noise)
    assert bool(jnp.array_equal(lv_m, lv)), "module wrapper values mismatch"
    assert bool(jnp.array_equal(ls_m["occupancy"], ls["occupancy"])), "module wrapper occupancy mismatch"

    # sanity 1: barycentric weights of every expanded point sum to 1
    assert jnp.allclose(aux["weights"].sum(axis=1), 1.0, atol=1e-4), "weights do not sum to 1"

    # sanity 2: Pallas tiled one-hot occupancy == plain-JAX scatter of the same slots
    ref_touch = jnp.zeros((capacity,), jnp.bool_).at[aux["slots"].reshape(-1)].set(True)
    ref_occ = jnp.logical_or(base_occ, ref_touch)
    assert bool(jnp.array_equal(ls["occupancy"], ref_occ)), "expanded occupancy mismatch"

    # sanity 3: expansion only adds vertices; old vertex values preserved, new vertices zero
    assert bool(jnp.all(jnp.logical_or(~base_occ, ls["occupancy"]))), "expansion lost vertices"
    assert bool(jnp.all(jnp.where(base_occ[:, None], lv - base_values, lv) == 0.0)), \
        "value expansion wrong"

    print("KERNEL_OK")
</pallas_src>

<mosaic_0001>
module attributes {stable_mosaic.version = 11 : i64} {
  func.func @_expand_coords_kernel(%arg0: i32, %arg1: memref<3x8x256xf32, #tpu.memory_space<vmem>>, %arg2: memref<4x8x256xi32, #tpu.memory_space<vmem>>) attributes {dimension_semantics = [#tpu.dimension_semantics<parallel>], iteration_bounds = array<i64: 1>, scalar_prefetch = 0 : i64, scratch_operands = 0 : i64, tpu.core_type = #tpu.core_type<tc>, window_params = [{transform_indices = @transform_0, window_bounds = array<i64: 3, 8, 256>}, {transform_indices = @transform_1, window_bounds = array<i64: 4, 8, 256>}]} {
    %cst = arith.constant 0.000000e+00 : f32
    %0 = vector.broadcast %cst : f32 to vector<8x256xf32>
    %c2 = arith.constant 2 : index
    %c0 = arith.constant 0 : index
    %c0_0 = arith.constant 0 : index
    %1 = vector.load %arg1[%c2, %c0, %c0_0] : memref<3x8x256xf32, #tpu.memory_space<vmem>>, vector<1x8x256xf32>
    %2 = vector.shape_cast %1 : vector<1x8x256xf32> to vector<8x256xf32>
    %cst_1 = arith.constant 3.77123618 : f32
    %3 = vector.broadcast %cst_1 : f32 to vector<8x256xf32>
    %4 = arith.mulf %2, %3 : vector<8x256xf32>
    %cst_2 = arith.constant 3.000000e+00 : f32
    %5 = vector.broadcast %cst_2 : f32 to vector<8x256xf32>
    %6 = arith.mulf %5, %4 : vector<8x256xf32>
    %7 = arith.subf %0, %6 : vector<8x256xf32>
    %8 = arith.addf %0, %4 : vector<8x256xf32>
    %c1 = arith.constant 1 : index
    %c0_3 = arith.constant 0 : index
    %c0_4 = arith.constant 0 : index
    %9 = vector.load %arg1[%c1, %c0_3, %c0_4] : memref<3x8x256xf32, #tpu.memory_space<vmem>>, vector<1x8x256xf32>
    %10 = vector.shape_cast %9 : vector<1x8x256xf32> to vector<8x256xf32>
    %cst_5 = arith.constant 5.33333349 : f32
    %11 = vector.broadcast %cst_5 : f32 to vector<8x256xf32>
    %12 = arith.mulf %10, %11 : vector<8x256xf32>
    %cst_6 = arith.constant 2.000000e+00 : f32
    %13 = vector.broadcast %cst_6 : f32 to vector<8x256xf32>
    %14 = arith.mulf %13, %12 : vector<8x256xf32>
    %15 = arith.subf %8, %14 : vector<8x256xf32>
    %16 = arith.addf %8, %12 : vector<8x256xf32>
    %c0_7 = arith.constant 0 : index
    %c0_8 = arith.constant 0 : index
    %c0_9 = arith.constant 0 : index
    %17 = vector.load %arg1[%c0_7, %c0_8, %c0_9] : memref<3x8x256xf32, #tpu.memory_space<vmem>>, vector<1x8x256xf32>
    %18 = vector.shape_cast %17 : vector<1x8x256xf32> to vector<8x256xf32>
    %cst_10 = arith.constant 9.23760414 : f32
    %19 = vector.broadcast %cst_10 : f32 to vector<8x256xf32>
    %20 = arith.mulf %18, %19 : vector<8x256xf32>
    %cst_11 = arith.constant 1.000000e+00 : f32
    %21 = vector.broadcast %cst_11 : f32 to vector<8x256xf32>
    %22 = arith.mulf %21, %20 : vector<8x256xf32>
    %23 = arith.subf %16, %22 : vector<8x256xf32>
    %24 = arith.addf %16, %20 : vector<8x256xf32>
    %cst_12 = arith.constant 0.000000e+00 : f32
    %25 = vector.broadcast %cst_12 : f32 to vector<8x256xf32>
    %cst_13 = arith.constant 2.500000e-01 : f32
    %26 = vector.broadcast %cst_13 : f32 to vector<8x256xf32>
    %27 = arith.mulf %24, %26 : vector<8x256xf32>
    %28 = math.ceil %27 : vector<8x256xf32>
    %cst_14 = arith.constant 4.000000e+00 : f32
    %29 = vector.broadcast %cst_14 : f32 to vector<8x256xf32>
    %30 = arith.mulf %28, %29 : vector<8x256xf32>
    %31 = math.floor %27 : vector<8x256xf32>
    %cst_15 = arith.constant 4.000000e+00 : f32
    %32 = vector.broadcast %cst_15 : f32 to vector<8x256xf32>
    %33 = arith.mulf %31, %32 : vector<8x256xf32>
    %34 = arith.subf %30, %24 : vector<8x256xf32>
    %35 = arith.subf %24, %33 : vector<8x256xf32>
    %36 = arith.cmpf olt, %34, %35 : vector<8x256xf32>
    %37 = arith.select %36, %30, %33 : vector<8x256xi1>, vector<8x256xf32>
    %38 = arith.subf %24, %37 : vector<8x256xf32>
    %39 = arith.addf %25, %37 : vector<8x256xf32>
    %cst_16 = arith.constant 2.500000e-01 : f32
    %40 = vector.broadcast %cst_16 : f32 to vector<8x256xf32>
    %41 = arith.mulf %23, %40 : vector<8x256xf32>
    %42 = math.ceil %41 : vector<8x256xf32>
    %cst_17 = arith.constant 4.000000e+00 : f32
    %43 = vector.broadcast %cst_17 : f32 to vector<8x256xf32>
    %44 = arith.mulf %42, %43 : vector<8x256xf32>
    %45 = math.floor %41 : vector<8x256xf32>
    %cst_18 = arith.constant 4.000000e+00 : f32
    %46 = vector.broadcast %cst_18 : f32 to vector<8x256xf32>
    %47 = arith.mulf %45, %46 : vector<8x256xf32>
    %48 = arith.subf %44, %23 : vector<8x256xf32>
    %49 = arith.subf %23, %47 : vector<8x256xf32>
    %50 = arith.cmpf olt, %48, %49 : vector<8x256xf32>
    %51 = arith.select %50, %44, %47 : vector<8x256xi1>, vector<8x256xf32>
    %52 = arith.subf %23, %51 : vector<8x256xf32>
    %53 = arith.addf %39, %51 : vector<8x256xf32>
    %cst_19 = arith.constant 2.500000e-01 : f32
    %54 = vector.broadcast %cst_19 : f32 to vector<8x256xf32>
    %55 = arith.mulf %15, %54 : vector<8x256xf32>
    %56 = math.ceil %55 : vector<8x256xf32>
    %cst_20 = arith.constant 4.000000e+00 : f32
    %57 = vector.broadcast %cst_20 : f32 to vector<8x256xf32>
    %58 = arith.mulf %56, %57 : vector<8x256xf32>
    %59 = math.floor %55 : vector<8x256xf32>
    %cst_21 = arith.constant 4.000000e+00 : f32
    %60 = vector.broadcast %cst_21 : f32 to vector<8x256xf32>
    %61 = arith.mulf %59, %60 : vector<8x256xf32>
    %62 = arith.subf %58, %15 : vector<8x256xf32>
    %63 = arith.subf %15, %61 : vector<8x256xf32>
    %64 = arith.cmpf olt, %62, %63 : vector<8x256xf32>
    %65 = arith.select %64, %58, %61 : vector<8x256xi1>, vector<8x256xf32>
    %66 = arith.subf %15, %65 : vector<8x256xf32>
    %67 = arith.addf %53, %65 : vector<8x256xf32>
    %cst_22 = arith.constant 2.500000e-01 : f32
    %68 = vector.broadcast %cst_22 : f32 to vector<8x256xf32>
    %69 = arith.mulf %7, %68 : vector<8x256xf32>
    %70 = math.ceil %69 : vector<8x256xf32>
    %cst_23 = arith.constant 4.000000e+00 : f32
    %71 = vector.broadcast %cst_23 : f32 to vector<8x256xf32>
    %72 = arith.mulf %70, %71 : vector<8x256xf32>
    %73 = math.floor %69 : vector<8x256xf32>
    %cst_24 = arith.constant 4.000000e+00 : f32
    %74 = vector.broadcast %cst_24 : f32 to vector<8x256xf32>
    %75 = arith.mulf %73, %74 : vector<8x256xf32>
    %76 = arith.subf %72, %7 : vector<8x256xf32>
    %77 = arith.subf %7, %75 : vector<8x256xf32>
    %78 = arith.cmpf olt, %76, %77 : vector<8x256xf32>
    %79 = arith.select %78, %72, %75 : vector<8x256xi1>, vector<8x256xf32>
    %80 = arith.subf %7, %79 : vector<8x256xf32>
    %81 = arith.addf %67, %79 : vector<8x256xf32>
    %cst_25 = arith.constant 2.500000e-01 : f32
    %82 = vector.broadcast %cst_25 : f32 to vector<8x256xf32>
    %83 = arith.mulf %81, %82 : vector<8x256xf32>
    %84 = math.roundeven %83 : vector<8x256xf32>
    %85 = arith.fptosi %84 : vector<8x256xf32> to vector<8x256xi32>
    %c0_i32 = arith.constant 0 : i32
    %86 = vector.broadcast %c0_i32 : i32 to vector<8x256xi32>
    %87 = arith.cmpf ogt, %52, %38 : vector<8x256xf32>
    %88 = arith.extui %87 : vector<8x256xi1> to vector<8x256xi32>
    %89 = arith.addi %86, %88 : vector<8x256xi32>
    %90 = arith.cmpf ogt, %66, %38 : vector<8x256xf32>
    %91 = arith.extui %90 : vector<8x256xi1> to vector<8x256xi32>
    %92 = arith.addi %89, %91 : vector<8x256xi32>
    %93 = arith.cmpf ogt, %80, %38 : vector<8x256xf32>
    %94 = arith.extui %93 : vector<8x256xi1> to vector<8x256xi32>
    %95 = arith.addi %92, %94 : vector<8x256xi32>
    %c0_i32_26 = arith.constant 0 : i32
    %96 = vector.broadcast %c0_i32_26 : i32 to vector<8x256xi32>
    %97 = arith.cmpf oge, %38, %52 : vector<8x256xf32>
    %98 = arith.extui %97 : vector<8x256xi1> to vector<8x256xi32>
    %99 = arith.addi %96, %98 : vector<8x256xi32>
    %100 = arith.cmpf ogt, %66, %52 : vector<8x256xf32>
    %101 = arith.extui %100 : vector<8x256xi1> to vector<8x256xi32>
    %102 = arith.addi %99, %101 : vector<8x256xi32>
    %103 = arith.cmpf ogt, %80, %52 : vector<8x256xf32>
    %104 = arith.extui %103 : vector<8x256xi1> to vector<8x256xi32>
    %105 = arith.addi %102, %104 : vector<8x256xi32>
    %c0_i32_27 = arith.constant 0 : i32
    %106 = vector.broadcast %c0_i32_27 : i32 to vector<8x256xi32>
    %107 = arith.cmpf oge, %38, %66 : vector<8x256xf32>
    %108 = arith.extui %107 : vector<8x256xi1> to vector<8x256xi32>
    %109 = arith.addi %106, %108 : vector<8x256xi32>
    %110 = arith.cmpf oge, %52, %66 : vector<8x256xf32>
    %111 = arith.extui %110 : vector<8x256xi1> to vector<8x256xi32>
    %112 = arith.addi %109, %111 : vector<8x256xi32>
    %113 = arith.cmpf ogt, %80, %66 : vector<8x256xf32>
    %114 = arith.extui %113 : vector<8x256xi1> to vector<8x256xi32>
    %115 = arith.addi %112, %114 : vector<8x256xi32>
    %116 = arith.addi %95, %85 : vector<8x256xi32>
    %c0_i32_28 = arith.constant 0 : i32
    %117 = vector.broadcast %c0_i32_28 : i32 to vector<8x256xi32>
    %118 = arith.cmpi slt, %116, %117 : vector<8x256xi32>
    %c4_i32 = arith.constant 4 : i32
    %c0_i32_29 = arith.constant 0 : i32
    %119 = vector.broadcast %c4_i32 : i32 to vector<8x256xi32>
    %120 = vector.broadcast %c0_i32_29 : i32 to vector<8x256xi32>
    %121 = arith.select %118, %119, %120 : vector<8x256xi1>, vector<8x256xi32>
    %c3_i32 = arith.constant 3 : i32
    %122 = vector.broadcast %c3_i32 : i32 to vector<8x256xi32>
    %123 = arith.cmpi sgt, %116, %122 : vector<8x256xi32>
    %c4_i32_30 = arith.constant 4 : i32
    %c0_i32_31 = arith.constant 0 : i32
    %124 = vector.broadcast %c4_i32_30 : i32 to vector<8x256xi32>
    %125 = vector.broadcast %c0_i32_31 : i32 to vector<8x256xi32>
    %126 = arith.select %123, %124, %125 : vector<8x256xi1>, vector<8x256xi32>
    %127 = arith.subi %121, %126 : vector<8x256xi32>
    %128 = arith.addi %116, %127 : vector<8x256xi32>
    %129 = arith.fptosi %37 : vector<8x256xf32> to vector<8x256xi32>
    %130 = arith.addi %129, %127 : vector<8x256xi32>
    %131 = arith.addi %105, %85 : vector<8x256xi32>
    %c0_i32_32 = arith.constant 0 : i32
    %132 = vector.broadcast %c0_i32_32 : i32 to vector<8x256xi32>
    %133 = arith.cmpi slt, %131, %132 : vector<8x256xi32>
    %c4_i32_33 = arith.constant 4 : i32
    %c0_i32_34 = arith.constant 0 : i32
    %134 = vector.broadcast %c4_i32_33 : i32 to vector<8x256xi32>
    %135 = vector.broadcast %c0_i32_34 : i32 to vector<8x256xi32>
    %136 = arith.select %133, %134, %135 : vector<8x256xi1>, vector<8x256xi32>
    %c3_i32_35 = arith.constant 3 : i32
    %137 = vector.broadcast %c3_i32_35 : i32 to vector<8x256xi32>
    %138 = arith.cmpi sgt, %131, %137 : vector<8x256xi32>
    %c4_i32_36 = arith.constant 4 : i32
    %c0_i32_37 = arith.constant 0 : i32
    %139 = vector.broadcast %c4_i32_36 : i32 to vector<8x256xi32>
    %140 = vector.broadcast %c0_i32_37 : i32 to vector<8x256xi32>
    %141 = arith.select %138, %139, %140 : vector<8x256xi1>, vector<8x256xi32>
    %142 = arith.subi %136, %141 : vector<8x256xi32>
    %143 = arith.addi %131, %142 : vector<8x256xi32>
    %144 = arith.fptosi %51 : vector<8x256xf32> to vector<8x256xi32>
    %145 = arith.addi %144, %142 : vector<8x256xi32>
    %146 = arith.addi %115, %85 : vector<8x256xi32>
    %c0_i32_38 = arith.constant 0 : i32
    %147 = vector.broadcast %c0_i32_38 : i32 to vector<8x256xi32>
    %148 = arith.cmpi slt, %146, %147 : vector<8x256xi32>
    %c4_i32_39 = arith.constant 4 : i32
    %c0_i32_40 = arith.constant 0 : i32
    %149 = vector.broadcast %c4_i32_39 : i32 to vector<8x256xi32>
    %150 = vector.broadcast %c0_i32_40 : i32 to vector<8x256xi32>
    %151 = arith.select %148, %149, %150 : vector<8x256xi1>, vector<8x256xi32>
    %c3_i32_41 = arith.constant 3 : i32
    %152 = vector.broadcast %c3_i32_41 : i32 to vector<8x256xi32>
    %153 = arith.cmpi sgt, %146, %152 : vector<8x256xi32>
    %c4_i32_42 = arith.constant 4 : i32
    %c0_i32_43 = arith.constant 0 : i32
    %154 = vector.broadcast %c4_i32_42 : i32 to vector<8x256xi32>
    %155 = vector.broadcast %c0_i32_43 : i32 to vector<8x256xi32>
    %156 = arith.select %153, %154, %155 : vector<8x256xi1>, vector<8x256xi32>
    %157 = arith.subi %151, %156 : vector<8x256xi32>
    %158 = arith.addi %146, %157 : vector<8x256xi32>
    %159 = arith.fptosi %65 : vector<8x256xf32> to vector<8x256xi32>
    %160 = arith.addi %159, %157 : vector<8x256xi32>
    %c0_i32_44 = arith.constant 0 : i32
    %161 = vector.broadcast %c0_i32_44 : i32 to vector<8x256xi32>
    %c0_i32_45 = arith.constant 0 : i32
    %162 = vector.broadcast %c0_i32_45 : i32 to vector<8x256xi32>
    %163 = arith.addi %130, %162 : vector<8x256xi32>
    %c3_i32_46 = arith.constant 3 : i32
    %164 = vector.broadcast %c3_i32_46 : i32 to vector<8x256xi32>
    %165 = arith.cmpi sgt, %128, %164 : vector<8x256xi32>
    %c4_i32_47 = arith.constant 4 : i32
    %c0_i32_48 = arith.constant 0 : i32
    %166 = vector.broadcast %c4_i32_47 : i32 to vector<8x256xi32>
    %167 = vector.broadcast %c0_i32_48 : i32 to vector<8x256xi32>
    %168 = arith.select %165, %166, %167 : vector<8x256xi1>, vector<8x256xi32>
    %169 = arith.subi %163, %168 : vector<8x256xi32>
    %170 = arith.addi %161, %169 : vector<8x256xi32>
    %c2531011_i32 = arith.constant 2531011 : i32
    %171 = vector.broadcast %c2531011_i32 : i32 to vector<8x256xi32>
    %172 = arith.muli %170, %171 : vector<8x256xi32>
    %c0_i32_49 = arith.constant 0 : i32
    %173 = vector.broadcast %c0_i32_49 : i32 to vector<8x256xi32>
    %174 = arith.addi %145, %173 : vector<8x256xi32>
    %c3_i32_50 = arith.constant 3 : i32
    %175 = vector.broadcast %c3_i32_50 : i32 to vector<8x256xi32>
    %176 = arith.cmpi sgt, %143, %175 : vector<8x256xi32>
    %c4_i32_51 = arith.constant 4 : i32
    %c0_i32_52 = arith.constant 0 : i32
    %177 = vector.broadcast %c4_i32_51 : i32 to vector<8x256xi32>
    %178 = vector.broadcast %c0_i32_52 : i32 to vector<8x256xi32>
    %179 = arith.select %176, %177, %178 : vector<8x256xi1>, vector<8x256xi32>
    %180 = arith.subi %174, %179 : vector<8x256xi32>
    %181 = arith.addi %172, %180 : vector<8x256xi32>
    %c2531011_i32_53 = arith.constant 2531011 : i32
    %182 = vector.broadcast %c2531011_i32_53 : i32 to vector<8x256xi32>
    %183 = arith.muli %181, %182 : vector<8x256xi32>
    %c0_i32_54 = arith.constant 0 : i32
    %184 = vector.broadcast %c0_i32_54 : i32 to vector<8x256xi32>
    %185 = arith.addi %160, %184 : vector<8x256xi32>
    %c3_i32_55 = arith.constant 3 : i32
    %186 = vector.broadcast %c3_i32_55 : i32 to vector<8x256xi32>
    %187 = arith.cmpi sgt, %158, %186 : vector<8x256xi32>
    %c4_i32_56 = arith.constant 4 : i32
    %c0_i32_57 = arith.constant 0 : i32
    %188 = vector.broadcast %c4_i32_56 : i32 to vector<8x256xi32>
    %189 = vector.broadcast %c0_i32_57 : i32 to vector<8x256xi32>
    %190 = arith.select %187, %188, %189 : vector<8x256xi1>, vector<8x256xi32>
    %191 = arith.subi %185, %190 : vector<8x256xi32>
    %192 = arith.addi %183, %191 : vector<8x256xi32>
    %c2531011_i32_58 = arith.constant 2531011 : i32
    %193 = vector.broadcast %c2531011_i32_58 : i32 to vector<8x256xi32>
    %194 = arith.muli %192, %193 : vector<8x256xi32>
    %c2047_i32 = arith.constant 2047 : i32
    %195 = vector.broadcast %c2047_i32 : i32 to vector<8x256xi32>
    %196 = arith.andi %194, %195 : vector<8x256xi32>
    %c0_59 = arith.constant 0 : index
    %c0_60 = arith.constant 0 : index
    %c0_61 = arith.constant 0 : index
    %197 = vector.load %arg2[%c0_59, %c0_60, %c0_61] : memref<4x8x256xi32, #tpu.memory_space<vmem>>, vector<1x8x256xi32>
    %198 = vector.shape_cast %197 : vector<1x8x256xi32> to vector<8x256xi32>
    %199 = vector.shape_cast %196 : vector<8x256xi32> to vector<1x8x256xi32>
    tpu.vector_store %arg2[%c0_59, %c0_60, %c0_61], %199 {strides = array<i32>} : memref<4x8x256xi32, #tpu.memory_space<vmem>>, vector<1x8x256xi32>,
    %c0_i32_62 = arith.constant 0 : i32
    %200 = vector.broadcast %c0_i32_62 : i32 to vector<8x256xi32>
    %c1_i32 = arith.constant 1 : i32
    %201 = vector.broadcast %c1_i32 : i32 to vector<8x256xi32>
    %202 = arith.addi %130, %201 : vector<8x256xi32>
    %c2_i32 = arith.constant 2 : i32
    %203 = vector.broadcast %c2_i32 : i32 to vector<8x256xi32>
    %204 = arith.cmpi sgt, %128, %203 : vector<8x256xi32>
    %c4_i32_63 = arith.constant 4 : i32
    %c0_i32_64 = arith.constant 0 : i32
    %205 = vector.broadcast %c4_i32_63 : i32 to vector<8x256xi32>
    %206 = vector.broadcast %c0_i32_64 : i32 to vector<8x256xi32>
    %207 = arith.select %204, %205, %206 : vector<8x256xi1>, vector<8x256xi32>
    %208 = arith.subi %202, %207 : vector<8x256xi32>
    %209 = arith.addi %200, %208 : vector<8x256xi32>
    %c2531011_i32_65 = arith.constant 2531011 : i32
    %210 = vector.broadcast %c2531011_i32_65 : i32 to vector<8x256xi32>
    %211 = arith.muli %209, %210 : vector<8x256xi32>
    %c1_i32_66 = arith.constant 1 : i32
    %212 = vector.broadcast %c1_i32_66 : i32 to vector<8x256xi32>
    %213 = arith.addi %145, %212 : vector<8x256xi32>
    %c2_i32_67 = arith.constant 2 : i32
    %214 = vector.broadcast %c2_i32_67 : i32 to vector<8x256xi32>
    %215 = arith.cmpi sgt, %143, %214 : vector<8x256xi32>
    %c4_i32_68 = arith.constant 4 : i32
    %c0_i32_69 = arith.constant 0 : i32
    %216 = vector.broadcast %c4_i32_68 : i32 to vector<8x256xi32>
    %217 = vector.broadcast %c0_i32_69 : i32 to vector<8x256xi32>
    %218 = arith.select %215, %216, %217 : vector<8x256xi1>, vector<8x256xi32>
    %219 = arith.subi %213, %218 : vector<8x256xi32>
    %220 = arith.addi %211, %219 : vector<8x256xi32>
    %c2531011_i32_70 = arith.constant 2531011 : i32
    %221 = vector.broadcast %c2531011_i32_70 : i32 to vector<8x256xi32>
    %222 = arith.muli %220, %221 : vector<8x256xi32>
    %c1_i32_71 = arith.constant 1 : i32
    %223 = vector.broadcast %c1_i32_71 : i32 to vector<8x256xi32>
    %224 = arith.addi %160, %223 : vector<8x256xi32>
    %c2_i32_72 = arith.constant 2 : i32
    %225 = vector.broadcast %c2_i32_72 : i32 to vector<8x256xi32>
    %226 = arith.cmpi sgt, %158, %225 : vector<8x256xi32>
    %c4_i32_73 = arith.constant 4 : i32
    %c0_i32_74 = arith.constant 0 : i32
    %227 = vector.broadcast %c4_i32_73 : i32 to vector<8x256xi32>
    %228 = vector.broadcast %c0_i32_74 : i32 to vector<8x256xi32>
    %229 = arith.select %226, %227, %228 : vector<8x256xi1>, vector<8x256xi32>
    %230 = arith.subi %224, %229 : vector<8x256xi32>
    %231 = arith.addi %222, %230 : vector<8x256xi32>
    %c2531011_i32_75 = arith.constant 2531011 : i32
    %232 = vector.broadcast %c2531011_i32_75 : i32 to vector<8x256xi32>
    %233 = arith.muli %231, %232 : vector<8x256xi32>
    %c2047_i32_76 = arith.constant 2047 : i32
    %234 = vector.broadcast %c2047_i32_76 : i32 to vector<8x256xi32>
    %235 = arith.andi %233, %234 : vector<8x256xi32>
    %c1_77 = arith.constant 1 : index
    %c0_78 = arith.constant 0 : index
    %c0_79 = arith.constant 0 : index
    %236 = vector.load %arg2[%c1_77, %c0_78, %c0_79] : memref<4x8x256xi32, #tpu.memory_space<vmem>>, vector<1x8x256xi32>
    %237 = vector.shape_cast %236 : vector<1x8x256xi32> to vector<8x256xi32>
    %238 = vector.shape_cast %235 : vector<8x256xi32> to vector<1x8x256xi32>
    tpu.vector_store %arg2[%c1_77, %c0_78, %c0_79], %238 {strides = array<i32>} : memref<4x8x256xi32, #tpu.memory_space<vmem>>, vector<1x8x256xi32>,
    %c0_i32_80 = arith.constant 0 : i32
    %239 = vector.broadcast %c0_i32_80 : i32 to vector<8x256xi32>
    %c2_i32_81 = arith.constant 2 : i32
    %240 = vector.broadcast %c2_i32_81 : i32 to vector<8x256xi32>
    %241 = arith.addi %130, %240 : vector<8x256xi32>
    %c1_i32_82 = arith.constant 1 : i32
    %242 = vector.broadcast %c1_i32_82 : i32 to vector<8x256xi32>
    %243 = arith.cmpi sgt, %128, %242 : vector<8x256xi32>
    %c4_i32_83 = arith.constant 4 : i32
    %c0_i32_84 = arith.constant 0 : i32
    %244 = vector.broadcast %c4_i32_83 : i32 to vector<8x256xi32>
    %245 = vector.broadcast %c0_i32_84 : i32 to vector<8x256xi32>
    %246 = arith.select %243, %244, %245 : vector<8x256xi1>, vector<8x256xi32>
    %247 = arith.subi %241, %246 : vector<8x256xi32>
    %248 = arith.addi %239, %247 : vector<8x256xi32>
    %c2531011_i32_85 = arith.constant 2531011 : i32
    %249 = vector.broadcast %c2531011_i32_85 : i32 to vector<8x256xi32>
    %250 = arith.muli %248, %249 : vector<8x256xi32>
    %c2_i32_86 = arith.constant 2 : i32
    %251 = vector.broadcast %c2_i32_86 : i32 to vector<8x256xi32>
    %252 = arith.addi %145, %251 : vector<8x256xi32>
    %c1_i32_87 = arith.constant 1 : i32
    %253 = vector.broadcast %c1_i32_87 : i32 to vector<8x256xi32>
    %254 = arith.cmpi sgt, %143, %253 : vector<8x256xi32>
    %c4_i32_88 = arith.constant 4 : i32
    %c0_i32_89 = arith.constant 0 : i32
    %255 = vector.broadcast %c4_i32_88 : i32 to vector<8x256xi32>
    %256 = vector.broadcast %c0_i32_89 : i32 to vector<8x256xi32>
    %257 = arith.select %254, %255, %256 : vector<8x256xi1>, vector<8x256xi32>
    %258 = arith.subi %252, %257 : vector<8x256xi32>
    %259 = arith.addi %250, %258 : vector<8x256xi32>
    %c2531011_i32_90 = arith.constant 2531011 : i32
    %260 = vector.broadcast %c2531011_i32_90 : i32 to vector<8x256xi32>
    %261 = arith.muli %259, %260 : vector<8x256xi32>
    %c2_i32_91 = arith.constant 2 : i32
    %262 = vector.broadcast %c2_i32_91 : i32 to vector<8x256xi32>
    %263 = arith.addi %160, %262 : vector<8x256xi32>
    %c1_i32_92 = arith.constant 1 : i32
    %264 = vector.broadcast %c1_i32_92 : i32 to vector<8x256xi32>
    %265 = arith.cmpi sgt, %158, %264 : vector<8x256xi32>
    %c4_i32_93 = arith.constant 4 : i32
    %c0_i32_94 = arith.constant 0 : i32
    %266 = vector.broadcast %c4_i32_93 : i32 to vector<8x256xi32>
    %267 = vector.broadcast %c0_i32_94 : i32 to vector<8x256xi32>
    %268 = arith.select %265, %266, %267 : vector<8x256xi1>, vector<8x256xi32>
    %269 = arith.subi %263, %268 : vector<8x256xi32>
    %270 = arith.addi %261, %269 : vector<8x256xi32>
    %c2531011_i32_95 = arith.constant 2531011 : i32
    %271 = vector.broadcast %c2531011_i32_95 : i32 to vector<8x256xi32>
    %272 = arith.muli %270, %271 : vector<8x256xi32>
    %c2047_i32_96 = arith.constant 2047 : i32
    %273 = vector.broadcast %c2047_i32_96 : i32 to vector<8x256xi32>
    %274 = arith.andi %272, %273 : vector<8x256xi32>
    %c2_97 = arith.constant 2 : index
    %c0_98 = arith.constant 0 : index
    %c0_99 = arith.constant 0 : index
    %275 = vector.load %arg2[%c2_97, %c0_98, %c0_99] : memref<4x8x256xi32, #tpu.memory_space<vmem>>, vector<1x8x256xi32>
    %276 = vector.shape_cast %275 : vector<1x8x256xi32> to vector<8x256xi32>
    %277 = vector.shape_cast %274 : vector<8x256xi32> to vector<1x8x256xi32>
    tpu.vector_store %arg2[%c2_97, %c0_98, %c0_99], %277 {strides = array<i32>} : memref<4x8x256xi32, #tpu.memory_space<vmem>>, vector<1x8x256xi32>,
    %c0_i32_100 = arith.constant 0 : i32
    %278 = vector.broadcast %c0_i32_100 : i32 to vector<8x256xi32>
    %c3_i32_101 = arith.constant 3 : i32
    %279 = vector.broadcast %c3_i32_101 : i32 to vector<8x256xi32>
    %280 = arith.addi %130, %279 : vector<8x256xi32>
    %c0_i32_102 = arith.constant 0 : i32
    %281 = vector.broadcast %c0_i32_102 : i32 to vector<8x256xi32>
    %282 = arith.cmpi sgt, %128, %281 : vector<8x256xi32>
    %c4_i32_103 = arith.constant 4 : i32
    %c0_i32_104 = arith.constant 0 : i32
    %283 = vector.broadcast %c4_i32_103 : i32 to vector<8x256xi32>
    %284 = vector.broadcast %c0_i32_104 : i32 to vector<8x256xi32>
    %285 = arith.select %282, %283, %284 : vector<8x256xi1>, vector<8x256xi32>
    %286 = arith.subi %280, %285 : vector<8x256xi32>
    %287 = arith.addi %278, %286 : vector<8x256xi32>
    %c2531011_i32_105 = arith.constant 2531011 : i32
    %288 = vector.broadcast %c2531011_i32_105 : i32 to vector<8x256xi32>
    %289 = arith.muli %287, %288 : vector<8x256xi32>
    %c3_i32_106 = arith.constant 3 : i32
    %290 = vector.broadcast %c3_i32_106 : i32 to vector<8x256xi32>
    %291 = arith.addi %145, %290 : vector<8x256xi32>
    %c0_i32_107 = arith.constant 0 : i32
    %292 = vector.broadcast %c0_i32_107 : i32 to vector<8x256xi32>
    %293 = arith.cmpi sgt, %143, %292 : vector<8x256xi32>
    %c4_i32_108 = arith.constant 4 : i32
    %c0_i32_109 = arith.constant 0 : i32
    %294 = vector.broadcast %c4_i32_108 : i32 to vector<8x256xi32>
    %295 = vector.broadcast %c0_i32_109 : i32 to vector<8x256xi32>
    %296 = arith.select %293, %294, %295 : vector<8x256xi1>, vector<8x256xi32>
    %297 = arith.subi %291, %296 : vector<8x256xi32>
    %298 = arith.addi %289, %297 : vector<8x256xi32>
    %c2531011_i32_110 = arith.constant 2531011 : i32
    %299 = vector.broadcast %c2531011_i32_110 : i32 to vector<8x256xi32>
    %300 = arith.muli %298, %299 : vector<8x256xi32>
    %c3_i32_111 = arith.constant 3 : i32
    %301 = vector.broadcast %c3_i32_111 : i32 to vector<8x256xi32>
    %302 = arith.addi %160, %301 : vector<8x256xi32>
    %c0_i32_112 = arith.constant 0 : i32
    %303 = vector.broadcast %c0_i32_112 : i32 to vector<8x256xi32>
    %304 = arith.cmpi sgt, %158, %303 : vector<8x256xi32>
    %c4_i32_113 = arith.constant 4 : i32
    %c0_i32_114 = arith.constant 0 : i32
    %305 = vector.broadcast %c4_i32_113 : i32 to vector<8x256xi32>
    %306 = vector.broadcast %c0_i32_114 : i32 to vector<8x256xi32>
    %307 = arith.select %304, %305, %306 : vector<8x256xi1>, vector<8x256xi32>
    %308 = arith.subi %302, %307 : vector<8x256xi32>
    %309 = arith.addi %300, %308 : vector<8x256xi32>
    %c2531011_i32_115 = arith.constant 2531011 : i32
    %310 = vector.broadcast %c2531011_i32_115 : i32 to vector<8x256xi32>
    %311 = arith.muli %309, %310 : vector<8x256xi32>
    %c2047_i32_116 = arith.constant 2047 : i32
    %312 = vector.broadcast %c2047_i32_116 : i32 to vector<8x256xi32>
    %313 = arith.andi %311, %312 : vector<8x256xi32>
    %c3 = arith.constant 3 : index
    %c0_117 = arith.constant 0 : index
    %c0_118 = arith.constant 0 : index
    %314 = vector.load %arg2[%c3, %c0_117, %c0_118] : memref<4x8x256xi32, #tpu.memory_space<vmem>>, vector<1x8x256xi32>
    %315 = vector.shape_cast %314 : vector<1x8x256xi32> to vector<8x256xi32>
    %316 = vector.shape_cast %313 : vector<8x256xi32> to vector<1x8x256xi32>
    tpu.vector_store %arg2[%c3, %c0_117, %c0_118], %316 {strides = array<i32>} : memref<4x8x256xi32, #tpu.memory_space<vmem>>, vector<1x8x256xi32>,
    return
  }
  func.func @transform_0(%arg0: i32) -> (i32, i32, i32) {
    %c0_i32 = arith.constant 0 : i32
    %c0_i32_0 = arith.constant 0 : i32
    %c0_i32_1 = arith.constant 0 : i32
    return %c0_i32, %c0_i32_0, %arg0 : i32, i32, i32
  }
  func.func @transform_1(%arg0: i32) -> (i32, i32, i32) {
    %c0_i32 = arith.constant 0 : i32
    %c0_i32_0 = arith.constant 0 : i32
    %c0_i32_1 = arith.constant 0 : i32
    return %c0_i32, %c0_i32_0, %arg0 : i32, i32, i32
  }
}

</mosaic_0001>

<llo_original>
// kernel: tpu_custom_call.1
$region0: #{tpu_custom_call.1}
  #allocation0 [shape = 'u32[]', space=smem, size = 0x4, offset = 0x4, fixed_abs, tag = 'smem constant byte address 0x4 - core index']
  #allocation1 [shape = 'u32[144,128]{1,0:T(1,128)}', space=vmem, size = 0x12000, scoped, tag = 'internal scratch']
  %s0 = inlined_call_operand.hbm [shape: f32[3,8,256], index: 0, kind: input, shape index: {}]
  %s1 = inlined_call_operand.hbm [shape: s32[4,8,256], index: 1, kind: output, shape index: {}]
  %s2 = sld [smem:[#allocation0]]
  $region18: #{tpu_custom_call.1} parent=0
    _
  %s4 = ssub.s32 1, %s2
  %s5 = scalar_select 0, %s4, %s2
  $region1: #{tpu_custom_call.1} parent=0
    #allocation2 [shape = 'u8[24576]{0}', space=vmem, size = 0x6000, scoped, tag = 'input window, operand 0, single buffered']
    #allocation3 [shape = 's32[1]{0}', space=sflag, size = 0x4, scoped, tag = 'scoped memory for tpu_custom_call.1']
    #allocation4 [shape = 's32[1]{0}', space=sflag, size = 0x4, scoped, tag = 'scoped memory for tpu_custom_call.1']
    #allocation5 [shape = 'u8[32768]{0}', space=vmem, size = 0x8000, scoped, tag = 'output window, operand 0, single buffered']
    %6 = vsyncpa [#allocation3], 0
    %7 = vsyncpa [#allocation4], 0
    // Predicated region
    $region2: #{tpu_custom_call.1} parent=1 // pred_check
      _
    $region3: #{tpu_custom_call.1} parent=1 // pred_check_branch
      %9 = sbr.rel (0) target = $region5
    $region4: #{tpu_custom_call.1} parent=1 // pred_region
      %s11 = ssub.s32 768, 768
      %12 = vsyncadd [#allocation3], %s11
      %s13 = sshll.u32 [#allocation2], 4
      %s14 = int_to_ptr.vmem [resolvable:$true] %s13
      %19 = dma.hbm_to_vmem [thread:$0]  %s0, 768, %s14, [#allocation3], 256, 256, 16
    $region5: #{tpu_custom_call.1} parent=1 // pred_fallthru
      _
    // Predicated region
    $region6: #{tpu_custom_call.1} parent=1 // pred_check
      _
    $region7: #{tpu_custom_call.1} parent=1 // pred_check_branch
      %21 = sbr.rel (0) target = $region9
    $region8: #{tpu_custom_call.1} parent=1 // pred_region
      %22 = dma.done [#allocation3], 768
    $region9: #{tpu_custom_call.1} parent=1 // pred_fallthru
      _
    %s23 = scalar_lea.vmem [#allocation2], 32
    %v24 = vld [vmem:[%s23] sm:$0xff]
    %v25 = vld [vmem:[%s23 + $0x8] sm:$0xff]
    %v26 = vmul.f32 %v24, 3.7712362
    %v27 = vmul.f32 %v25, 3.7712362
    %v28 = vmul.f32 %v26, 3.0
    %v29 = vmul.f32 %v27, 3.0
    %v30 = vsub.f32 0.0, %v28
    %v31 = vsub.f32 0.0, %v29
    %v32 = vadd.f32 %v26, 0.0
    %v33 = vadd.f32 %v27, 0.0
    %s34 = scalar_lea.vmem [#allocation2], 16
    %v35 = vld [vmem:[%s34] sm:$0xff]
    %v36 = vld [vmem:[%s34 + $0x8] sm:$0xff]
    %v37 = vmul.f32 %v35, 5.3333335
    %v38 = vmul.f32 %v36, 5.3333335
    %v39 = vmul.f32 %v37, 2.0
    %v40 = vmul.f32 %v38, 2.0
    %v41 = vsub.f32 %v32, %v39
    %v42 = vsub.f32 %v33, %v40
    %v43 = vadd.f32 %v32, %v37
    %v44 = vadd.f32 %v33, %v38
    %v45 = vld [vmem:[#allocation2] sm:$0xff]
    %v46 = vld [vmem:[#allocation2 + $0x8] sm:$0xff]
    %v47 = vmul.f32 %v45, 9.237604
    %v48 = vmul.f32 %v46, 9.237604
    %v49 = vsub.f32 %v43, %v47
    %v50 = vsub.f32 %v44, %v48
    %v51 = vadd.f32 %v43, %v47
    %v52 = vadd.f32 %v44, %v48
    %v53 = vmul.f32 %v51, 0.25
    %v54 = vmul.f32 %v52, 0.25
    %v55 = vceil.f32 %v53
    %v56 = vceil.f32 %v54
    %v57 = vmul.f32 %v55, 4.0
    %v58 = vmul.f32 %v56, 4.0
    %v59 = vfloor.f32 %v53
    %v60 = vfloor.f32 %v54
    %v61 = vmul.f32 %v59, 4.0
    %v62 = vmul.f32 %v60, 4.0
    %v63 = vsub.f32 %v57, %v51
    %v64 = vsub.f32 %v58, %v52
    %v65 = vsub.f32 %v51, %v61
    %v66 = vsub.f32 %v52, %v62
    %vm67 = vcmp.lt.f32.partialorder %v63, %v65
    %vm68 = vcmp.lt.f32.partialorder %v64, %v66
    %v69 = vsel %vm67, %v57, %v61
    %v70 = vsel %vm68, %v58, %v62
    %v71 = vsub.f32 %v51, %v69
    %v72 = vsub.f32 %v52, %v70
    %v73 = vadd.f32 %v69, 0.0
    %v74 = vadd.f32 %v70, 0.0
    %v75 = vmul.f32 %v49, 0.25
    %v76 = vmul.f32 %v50, 0.25
    %v77 = vceil.f32 %v75
    %v78 = vceil.f32 %v76
    %v79 = vmul.f32 %v77, 4.0
    %v80 = vmul.f32 %v78, 4.0
    %v81 = vfloor.f32 %v75
    %v82 = vfloor.f32 %v76
    %v83 = vmul.f32 %v81, 4.0
    %v84 = vmul.f32 %v82, 4.0
    %v85 = vsub.f32 %v79, %v49
    %v86 = vsub.f32 %v80, %v50
    %v87 = vsub.f32 %v49, %v83
    %v88 = vsub.f32 %v50, %v84
    %vm89 = vcmp.lt.f32.partialorder %v85, %v87
    %vm90 = vcmp.lt.f32.partialorder %v86, %v88
    %v91 = vsel %vm89, %v79, %v83
    %v92 = vsel %vm90, %v80, %v84
    %v93 = vsub.f32 %v49, %v91
    %v94 = vsub.f32 %v50, %v92
    %v95 = vadd.f32 %v73, %v91
    %v96 = vadd.f32 %v74, %v92
    %v97 = vmul.f32 %v41, 0.25
    %v98 = vmul.f32 %v42, 0.25
    %v99 = vceil.f32 %v97
    %v100 = vceil.f32 %v98
    %v101 = vmul.f32 %v99, 4.0
    %v102 = vmul.f32 %v100, 4.0
    %v103 = vfloor.f32 %v97
    %v104 = vfloor.f32 %v98
    %v105 = vmul.f32 %v103, 4.0
    %v106 = vmul.f32 %v104, 4.0
    %v107 = vsub.f32 %v101, %v41
    %v108 = vsub.f32 %v102, %v42
    %v109 = vsub.f32 %v41, %v105
    %v110 = vsub.f32 %v42, %v106
    %vm111 = vcmp.lt.f32.partialorder %v107, %v109
    %vm112 = vcmp.lt.f32.partialorder %v108, %v110
    %v113 = vsel %vm111, %v101, %v105
    %v114 = vsel %vm112, %v102, %v106
    %v115 = vsub.f32 %v41, %v113
    %v116 = vsub.f32 %v42, %v114
    %v117 = vadd.f32 %v95, %v113
    %v118 = vadd.f32 %v96, %v114
    %v119 = vmul.f32 %v30, 0.25
    %v120 = vmul.f32 %v31, 0.25
    %v121 = vceil.f32 %v119
    %v122 = vceil.f32 %v120
    %v123 = vmul.f32 %v121, 4.0
    %v124 = vmul.f32 %v122, 4.0
    %v125 = vfloor.f32 %v119
    %v126 = vfloor.f32 %v120
    %v127 = vmul.f32 %v125, 4.0
    %v128 = vmul.f32 %v126, 4.0
    %v129 = vsub.f32 %v123, %v30
    %v130 = vsub.f32 %v124, %v31
    %v131 = vsub.f32 %v30, %v127
    %v132 = vsub.f32 %v31, %v128
    %vm133 = vcmp.lt.f32.partialorder %v129, %v131
    %vm134 = vcmp.lt.f32.partialorder %v130, %v132
    %v135 = vsel %vm133, %v123, %v127
    %v136 = vsel %vm134, %v124, %v128
    %v137 = vsub.f32 %v30, %v135
    %v138 = vsub.f32 %v31, %v136
    %v139 = vadd.f32 %v117, %v135
    %v140 = vadd.f32 %v118, %v136
    %v141 = vmul.f32 %v139, 0.25
    %v142 = vmul.f32 %v140, 0.25
    %v143 = vcvt.f32.s32.ties.to.even %v141
    %v144 = vcvt.f32.s32.ties.to.even %v142
    %vm145 = vcmp.gt.f32.partialorder %v93, %v71
    %vm146 = vcmp.gt.f32.partialorder %v94, %v72
    %v147 = vsel %vm145, 1, 0
    %v148 = vsel %vm146, 1, 0
    %vm149 = vcmp.gt.f32.partialorder %v115, %v71
    %vm150 = vcmp.gt.f32.partialorder %v116, %v72
    %v151 = vsel %vm149, 1, 0
    %v152 = vsel %vm150, 1, 0
    %v153 = vadd.s32 %v147, %v151
    %v154 = vadd.s32 %v148, %v152
    %vm155 = vcmp.gt.f32.partialorder %v137, %v71
    %vm156 = vcmp.gt.f32.partialorder %v138, %v72
    %v157 = vsel %vm155, 1, 0
    %v158 = vsel %vm156, 1, 0
    %v159 = vadd.s32 %v153, %v157
    %v160 = vadd.s32 %v154, %v158
    %vm161 = vcmp.ge.f32.partialorder %v71, %v93
    %vm162 = vcmp.ge.f32.partialorder %v72, %v94
    %v163 = vsel %vm161, 1, 0
    %v164 = vsel %vm162, 1, 0
    %vm165 = vcmp.gt.f32.partialorder %v115, %v93
    %vm166 = vcmp.gt.f32.partialorder %v116, %v94
    %v167 = vsel %vm165, 1, 0
    %v168 = vsel %vm166, 1, 0
    %v169 = vadd.s32 %v163, %v167
    %v170 = vadd.s32 %v164, %v168
    %vm171 = vcmp.gt.f32.partialorder %v137, %v93
    %vm172 = vcmp.gt.f32.partialorder %v138, %v94
    %v173 = vsel %vm171, 1, 0
    %v174 = vsel %vm172, 1, 0
    %v175 = vadd.s32 %v169, %v173
    %v176 = vadd.s32 %v170, %v174
    %vm177 = vcmp.ge.f32.partialorder %v71, %v115
    %vm178 = vcmp.ge.f32.partialorder %v72, %v116
    %v179 = vsel %vm177, 1, 0
    %v180 = vsel %vm178, 1, 0
    %vm181 = vcmp.ge.f32.partialorder %v93, %v115
    %vm182 = vcmp.ge.f32.partialorder %v94, %v116
    %v183 = vsel %vm181, 1, 0
    %v184 = vsel %vm182, 1, 0
    %v185 = vadd.s32 %v179, %v183
    %v186 = vadd.s32 %v180, %v184
    %vm187 = vcmp.gt.f32.partialorder %v137, %v115
    %vm188 = vcmp.gt.f32.partialorder %v138, %v116
    %v189 = vsel %vm187, 1, 0
    %v190 = vsel %vm188, 1, 0
    %v191 = vadd.s32 %v185, %v189
    %v192 = vadd.s32 %v186, %v190
    %v193 = vadd.s32 %v159, %v143
    %v194 = vadd.s32 %v160, %v144
    %vm195 = vcmp.lt.s32.totalorder %v193, 0
    %vm196 = vcmp.lt.s32.totalorder %v194, 0
    %v197 = vsel %vm195, 4, 0
    %v198 = vsel %vm196, 4, 0
    %vm199 = vcmp.gt.s32.totalorder %v193, 3
    %vm200 = vcmp.gt.s32.totalorder %v194, 3
    %v201 = vsel %vm199, 4, 0
    %v202 = vsel %vm200, 4, 0
    %v203 = vsub.s32 %v197, %v201
    %v204 = vsub.s32 %v198, %v202
    %v205 = vadd.s32 %v193, %v203
    %v206 = vadd.s32 %v194, %v204
    %v207 = vcvt.f32.s32.to.zero.pseudo %v69
    %v208 = vcvt.f32.s32.to.zero.pseudo %v70
    %v209 = vadd.s32 %v207, %v203
    %v210 = vadd.s32 %v208, %v204
    %v211 = vadd.s32 %v175, %v143
    %v212 = vadd.s32 %v176, %v144
    %vm213 = vcmp.lt.s32.totalorder %v211, 0
    %vm214 = vcmp.lt.s32.totalorder %v212, 0
    %v215 = vsel %vm213, 4, 0
    %v216 = vsel %vm214, 4, 0
    %vm217 = vcmp.gt.s32.totalorder %v211, 3
    %vm218 = vcmp.gt.s32.totalorder %v212, 3
    %v219 = vsel %vm217, 4, 0
    %v220 = vsel %vm218, 4, 0
    %v221 = vsub.s32 %v215, %v219
    %v222 = vsub.s32 %v216, %v220
    %v223 = vadd.s32 %v211, %v221
    %v224 = vadd.s32 %v212, %v222
    %v225 = vcvt.f32.s32.to.zero.pseudo %v91
    %v226 = vcvt.f32.s32.to.zero.pseudo %v92
    %v227 = vadd.s32 %v225, %v221
    %v228 = vadd.s32 %v226, %v222
    %v229 = vadd.s32 %v191, %v143
    %v230 = vadd.s32 %v192, %v144
    %vm231 = vcmp.lt.s32.totalorder %v229, 0
    %vm232 = vcmp.lt.s32.totalorder %v230, 0
    %v233 = vsel %vm231, 4, 0
    %v234 = vsel %vm232, 4, 0
    %vm235 = vcmp.gt.s32.totalorder %v229, 3
    %vm236 = vcmp.gt.s32.totalorder %v230, 3
    %v237 = vsel %vm235, 4, 0
    %v238 = vsel %vm236, 4, 0
    %v239 = vsub.s32 %v233, %v237
    %v240 = vsub.s32 %v234, %v238
    %v241 = vadd.s32 %v229, %v239
    %v242 = vadd.s32 %v230, %v240
    %v243 = vcvt.f32.s32.to.zero.pseudo %v113
    %v244 = vcvt.f32.s32.to.zero.pseudo %v114
    %v245 = vadd.s32 %v243, %v239
    %v246 = vadd.s32 %v244, %v240
    %vm247 = vcmp.gt.s32.totalorder %v205, 3
    %vm248 = vcmp.gt.s32.totalorder %v206, 3
    %v249 = vsel %vm247, 4, 0
    %v250 = vsel %vm248, 4, 0
    %v251 = vsub.s32 %v209, %v249
    %v252 = vsub.s32 %v210, %v250
    %v253 = vmul.u32 %v251, 2531011
    %v254 = vmul.u32 %v252, 2531011
    %vm255 = vcmp.gt.s32.totalorder %v223, 3
    %vm256 = vcmp.gt.s32.totalorder %v224, 3
    %v257 = vsel %vm255, 4, 0
    %v258 = vsel %vm256, 4, 0
    %v259 = vsub.s32 %v227, %v257
    %v260 = vsub.s32 %v228, %v258
    %v261 = vadd.s32 %v253, %v259
    %v262 = vadd.s32 %v254, %v260
    %v263 = vmul.u32 %v261, 2531011
    %v264 = vmul.u32 %v262, 2531011
    %vm265 = vcmp.gt.s32.totalorder %v241, 3
    %vm266 = vcmp.gt.s32.totalorder %v242, 3
    %v267 = vsel %vm265, 4, 0
    %v268 = vsel %vm266, 4, 0
    %v269 = vsub.s32 %v245, %v267
    %v270 = vsub.s32 %v246, %v268
    %v271 = vadd.s32 %v263, %v269
    %v272 = vadd.s32 %v264, %v270
    %v273 = vmul.u32 %v271, 2531011
    %v274 = vmul.u32 %v272, 2531011
    %v275 = vand.u32 %v273, 2047
    %v276 = vand.u32 %v274, 2047
    %277 = vst [vmem:[#allocation5] sm:$0xff] %v275
    %278 = vst [vmem:[#allocation5 + $0x8] sm:$0xff] %v276
    %v279 = vadd.s32 %v209, 1
    %v280 = vadd.s32 %v210, 1
    %vm281 = vcmp.gt.s32.totalorder %v205, 2
    %vm282 = vcmp.gt.s32.totalorder %v206, 2
    %v283 = vsel %vm281, 4, 0
    %v284 = vsel %vm282, 4, 0
    %v285 = vsub.s32 %v279, %v283
    %v286 = vsub.s32 %v280, %v284
    %v287 = vmul.u32 %v285, 2531011
    %v288 = vmul.u32 %v286, 2531011
    %v289 = vadd.s32 %v227, 1
    %v290 = vadd.s32 %v228, 1
    %vm291 = vcmp.gt.s32.totalorder %v223, 2
    %vm292 = vcmp.gt.s32.totalorder %v224, 2
    %v293 = vsel %vm291, 4, 0
    %v294 = vsel %vm292, 4, 0
    %v295 = vsub.s32 %v289, %v293
    %v296 = vsub.s32 %v290, %v294
    %v297 = vadd.s32 %v287, %v295
    %v298 = vadd.s32 %v288, %v296
    %v299 = vmul.u32 %v297, 2531011
    %v300 = vmul.u32 %v298, 2531011
    %v301 = vadd.s32 %v245, 1
    %v302 = vadd.s32 %v246, 1
    %vm303 = vcmp.gt.s32.totalorder %v241, 2
    %vm304 = vcmp.gt.s32.totalorder %v242, 2
    %v305 = vsel %vm303, 4, 0
    %v306 = vsel %vm304, 4, 0
    %v307 = vsub.s32 %v301, %v305
    %v308 = vsub.s32 %v302, %v306
    %v309 = vadd.s32 %v299, %v307
    %v310 = vadd.s32 %v300, %v308
    %v311 = vmul.u32 %v309, 2531011
    %v312 = vmul.u32 %v310, 2531011
    %v313 = vand.u32 %v311, 2047
    %v314 = vand.u32 %v312, 2047
    %s315 = scalar_lea.vmem [#allocation5], 16
    %316 = vst [vmem:[%s315] sm:$0xff] %v313
    %317 = vst [vmem:[%s315 + $0x8] sm:$0xff] %v314
    %v318 = vadd.s32 %v209, 2
    %v319 = vadd.s32 %v210, 2
    %vm320 = vcmp.gt.s32.totalorder %v205, 1
    %vm321 = vcmp.gt.s32.totalorder %v206, 1
    %v322 = vsel %vm320, 4, 0
    %v323 = vsel %vm321, 4, 0
    %v324 = vsub.s32 %v318, %v322
    %v325 = vsub.s32 %v319, %v323
    %v326 = vmul.u32 %v324, 2531011
    %v327 = vmul.u32 %v325, 2531011
    %v328 = vadd.s32 %v227, 2
    %v329 = vadd.s32 %v228, 2
    %vm330 = vcmp.gt.s32.totalorder %v223, 1
    %vm331 = vcmp.gt.s32.totalorder %v224, 1
    %v332 = vsel %vm330, 4, 0
    %v333 = vsel %vm331, 4, 0
    %v334 = vsub.s32 %v328, %v332
    %v335 = vsub.s32 %v329, %v333
    %v336 = vadd.s32 %v326, %v334
    %v337 = vadd.s32 %v327, %v335
    %v338 = vmul.u32 %v336, 2531011
    %v339 = vmul.u32 %v337, 2531011
    %v340 = vadd.s32 %v245, 2
    %v341 = vadd.s32 %v246, 2
    %vm342 = vcmp.gt.s32.totalorder %v241, 1
    %vm343 = vcmp.gt.s32.totalorder %v242, 1
    %v344 = vsel %vm342, 4, 0
    %v345 = vsel %vm343, 4, 0
    %v346 = vsub.s32 %v340, %v344
    %v347 = vsub.s32 %v341, %v345
    %v348 = vadd.s32 %v338, %v346
    %v349 = vadd.s32 %v339, %v347
    %v350 = vmul.u32 %v348, 2531011
    %v351 = vmul.u32 %v349, 2531011
    %v352 = vand.u32 %v350, 2047
    %v353 = vand.u32 %v351, 2047
    %s354 = scalar_lea.vmem [#allocation5], 32
    %355 = vst [vmem:[%s354] sm:$0xff] %v352
    %356 = vst [vmem:[%s354 + $0x8] sm:$0xff] %v353
    %v357 = vadd.s32 %v209, 3
    %v358 = vadd.s32 %v210, 3
    %vm359 = vcmp.gt.s32.totalorder %v205, 0
    %vm360 = vcmp.gt.s32.totalorder %v206, 0
    %v361 = vsel %vm359, 4, 0
    %v362 = vsel %vm360, 4, 0
    %v363 = vsub.s32 %v357, %v361
    %v364 = vsub.s32 %v358, %v362
    %v365 = vmul.u32 %v363, 2531011
    %v366 = vmul.u32 %v364, 2531011
    %v367 = vadd.s32 %v227, 3
    %v368 = vadd.s32 %v228, 3
    %vm369 = vcmp.gt.s32.totalorder %v223, 0
    %vm370 = vcmp.gt.s32.totalorder %v224, 0
    %v371 = vsel %vm369, 4, 0
    %v372 = vsel %vm370, 4, 0
    %v373 = vsub.s32 %v367, %v371
    %v374 = vsub.s32 %v368, %v372
    %v375 = vadd.s32 %v365, %v373
    %v376 = vadd.s32 %v366, %v374
    %v377 = vmul.u32 %v375, 2531011
    %v378 = vmul.u32 %v376, 2531011
    %v379 = vadd.s32 %v245, 3
    %v380 = vadd.s32 %v246, 3
    %vm381 = vcmp.gt.s32.totalorder %v241, 0
    %vm382 = vcmp.gt.s32.totalorder %v242, 0
    %v383 = vsel %vm381, 4, 0
    %v384 = vsel %vm382, 4, 0
    %v385 = vsub.s32 %v379, %v383
    %v386 = vsub.s32 %v380, %v384
    %v387 = vadd.s32 %v377, %v385
    %v388 = vadd.s32 %v378, %v386
    %v389 = vmul.u32 %v387, 2531011
    %v390 = vmul.u32 %v388, 2531011
    %v391 = vand.u32 %v389, 2047
    %v392 = vand.u32 %v390, 2047
    %s393 = scalar_lea.vmem [#allocation5], 48
    %394 = vst [vmem:[%s393] sm:$0xff] %v391
    %395 = vst [vmem:[%s393 + $0x8] sm:$0xff] %v392
    // Predicated region
    $region10: #{tpu_custom_call.1} parent=1 // pred_check
      _
    $region11: #{tpu_custom_call.1} parent=1 // pred_check_branch
      %397 = sbr.rel (0) target = $region13
    $region12: #{tpu_custom_call.1} parent=1 // pred_region
      %s399 = ssub.s32 1024, 1024
      %400 = vsyncadd [#allocation4], %s399
      %s401 = sshll.u32 [#allocation5], 4
      %s402 = int_to_ptr.vmem [resolvable:$true] %s401
      %407 = dma.vmem_to_hbm [thread:$0]  %s402, 1024, %s1, [#allocation4], 256, 256, 16
    $region13: #{tpu_custom_call.1} parent=1 // pred_fallthru
      _
    // Predicated region
    $region14: #{tpu_custom_call.1} parent=1 // pred_check
      _
    $region15: #{tpu_custom_call.1} parent=1 // pred_check_branch
      %409 = sbr.rel (0) target = $region17
    $region16: #{tpu_custom_call.1} parent=1 // pred_region
      %410 = dma.done [#allocation4], 1024
    $region17: #{tpu_custom_call.1} parent=1 // pred_fallthru
      _
    %411 = vsyncpa [#allocation3], 1
    %412 = vsyncpa [#allocation4], 1

</llo_original>
